<compile_context>
chip_gen: v7x
topology: tpu7x:2x2x1
jax: 0.10.0
libtpu: 0.0.40
codegen_flags: <defaults>
</compile_context>

<pallas_src>
import jax
import jax.numpy as jnp
import numpy as np
from jax.experimental import pallas as pl
from jax.experimental.pallas import tpu as pltpu


def flow_kernel(b_ref, z_ref, w_ref, u_ref, znew_ref, det_ref):
    z = z_ref[...]                 # [TB, D]  latent dim on lanes, batch on sublanes
    w = w_ref[...]                 # [1, D]
    u = u_ref[...]                 # [1, D]
    b = b_ref[0]                   # scalar (SMEM)

    # linear = z @ w + b : VPU multiply + XLU lane reduce (no MXU; mem-bound).
    linear = jnp.sum(z * w, axis=-1, keepdims=True) + b        # [TB, 1]
    act = jnp.tanh(linear)                                     # [TB, 1]  (EUP)

    # z_new = z + u * tanh(linear)
    znew_ref[...] = z + u * act                                # [TB, D]

    # psi @ u == (1 - tanh(linear)^2) * (w . u)
    wu = jnp.sum(w * u, axis=-1, keepdims=True)                # [1, 1]
    det_col = jnp.abs(1.0 + (1.0 - act * act) * wu)            # [TB, 1]

    # Lane-dense store: one [1, TB] row per grid step (XLU transpose is cheap).
    det_ref[...] = jnp.transpose(det_col, (1, 0))              # [1, TB]


def _round_up(x, m):
    return (x + m - 1) // m * m


def planar_flow(z, w, u, b):
    """z: [B, D] float32; w, u: [D]; b: [1]. Returns (z_new [B, D], det [B])."""
    B, D = z.shape
    dtype = z.dtype
    itemsize = jnp.dtype(dtype).itemsize

    # ---- tile-size selection -------------------------------------------------
    # Double-buffered z-in + z_new-out tiles ~= 4 * tb * D * itemsize bytes.
    vmem_budget = 12 * 1024 * 1024            # ample headroom under 32 MiB scoped
    max_tb = (vmem_budget // (4 * D * itemsize)) // 8 * 8
    max_tb = int(max(8, min(max_tb, 1024)))   # diminishing returns past ~1K rows
    n_tiles = max(1, pl.cdiv(B, max_tb))
    if n_tiles == 1 and B >= 512:
        n_tiles = 2                           # keep both v7x TensorCores busy
    tb = _round_up(pl.cdiv(B, n_tiles), 8)    # f32 sublane multiple
    Bp = n_tiles * tb

    if Bp != B:                               # ragged batch -> pad (rows discarded)
        z = jnp.pad(z, ((0, Bp - B), (0, 0)))

    w2 = w.reshape(1, D).astype(dtype)
    u2 = u.reshape(1, D).astype(dtype)

    z_new, det = pl.pallas_call(
        flow_kernel,
        out_shape=(
            jax.ShapeDtypeStruct((Bp, D), dtype),
            jax.ShapeDtypeStruct((n_tiles, 1, tb), dtype),     # lane-dense det rows
        ),
        grid_spec=pl.GridSpec(
            grid=(n_tiles,),
            in_specs=[
                pl.BlockSpec(memory_space=pltpu.SMEM),             # b (scalar)
                pl.BlockSpec((tb, D), lambda i: (i, 0)),           # z batch tile
                pl.BlockSpec((1, D), lambda i: (0, 0)),            # w (broadcast)
                pl.BlockSpec((1, D), lambda i: (0, 0)),            # u (broadcast)
            ],
            out_specs=[
                pl.BlockSpec((tb, D), lambda i: (i, 0)),           # z_new tile
                pl.BlockSpec((None, 1, tb), lambda i: (i, 0, 0)),  # det row, lane-dense
            ],
        ),
        compiler_params=pltpu.CompilerParams(
            dimension_semantics=("parallel",),
            vmem_limit_bytes=32 * 1024 * 1024,
        ),
    )(b, z, w2, u2)

    det = det.reshape(Bp)[:B]
    return z_new[:B], det


def planar_flow_ref(z, w, u, b):
    linear = z @ w + b[0]
    act = jnp.tanh(linear)
    z_new = z + u * act[:, None]
    psi = (1.0 - jnp.tanh(linear) ** 2)[:, None] * w
    det = jnp.abs(1.0 + psi @ u)
    return z_new, det


if __name__ == "__main__":
    batch, latent_dim = 16, 32

    key = jax.random.PRNGKey(0)
    kz, ku, kw, kb = jax.random.split(key, 4)

    z = jax.random.normal(kz, (batch, latent_dim), dtype=jnp.float32)
    u = jax.random.normal(ku, (latent_dim,), dtype=jnp.float32)
    w = jax.random.normal(kw, (latent_dim,), dtype=jnp.float32)
    b = jax.random.normal(kb, (1,), dtype=jnp.float32)

    # Small case: single grid step, whole batch in one tile.
    z_new, det = planar_flow(z, w, u, b)
    jax.block_until_ready((z_new, det))
    z_exp, det_exp = planar_flow_ref(z, w, u, b)
    np.testing.assert_allclose(np.asarray(z_new), np.asarray(z_exp), rtol=1e-5, atol=1e-5)
    np.testing.assert_allclose(np.asarray(det), np.asarray(det_exp), rtol=1e-4, atol=1e-5)

    # Ragged, multi-tile case: exercises padding and the 2-tile (v7x) path.
    z_big = jax.random.normal(jax.random.PRNGKey(1), (1000, latent_dim), dtype=jnp.float32)
    zb_new, detb = planar_flow(z_big, w, u, b)
    jax.block_until_ready((zb_new, detb))
    zb_exp, detb_exp = planar_flow_ref(z_big, w, u, b)
    np.testing.assert_allclose(np.asarray(zb_new), np.asarray(zb_exp), rtol=1e-5, atol=1e-5)
    np.testing.assert_allclose(np.asarray(detb), np.asarray(detb_exp), rtol=1e-4, atol=1e-5)

    print("KERNEL_OK")
</pallas_src>

<mosaic_0001>
module attributes {stable_mosaic.version = 11 : i64} {
  func.func @flow_kernel(%arg0: i32, %arg1: memref<1xf32, #tpu.memory_space<smem>>, %arg2: memref<16x32xf32, #tpu.memory_space<vmem>>, %arg3: memref<1x32xf32, #tpu.memory_space<vmem>>, %arg4: memref<1x32xf32, #tpu.memory_space<vmem>>, %arg5: memref<16x32xf32, #tpu.memory_space<vmem>>, %arg6: memref<1x1x16xf32, #tpu.memory_space<vmem>>) attributes {dimension_semantics = [#tpu.dimension_semantics<parallel>], iteration_bounds = array<i64: 1>, scalar_prefetch = 0 : i64, scratch_operands = 0 : i64, tpu.core_type = #tpu.core_type<tc>, window_params = [{transform_indices = @transform_0, window_bounds = array<i64: 1>}, {transform_indices = @transform_1, window_bounds = array<i64: 16, 32>}, {pipeline_mode = #tpu.pipeline_mode<synchronous>, transform_indices = @transform_2, window_bounds = array<i64: 1, 32>}, {pipeline_mode = #tpu.pipeline_mode<synchronous>, transform_indices = @transform_3, window_bounds = array<i64: 1, 32>}, {transform_indices = @transform_4, window_bounds = array<i64: 16, 32>}, {transform_indices = @transform_5, window_bounds = array<i64: 1, 1, 16>}]} {
    %c0 = arith.constant 0 : index
    %c0_0 = arith.constant 0 : index
    %0 = vector.load %arg2[%c0, %c0_0] : memref<16x32xf32, #tpu.memory_space<vmem>>, vector<16x32xf32>
    %c0_1 = arith.constant 0 : index
    %c0_2 = arith.constant 0 : index
    %1 = vector.load %arg3[%c0_1, %c0_2] : memref<1x32xf32, #tpu.memory_space<vmem>>, vector<1x32xf32>
    %c0_3 = arith.constant 0 : index
    %c0_4 = arith.constant 0 : index
    %2 = vector.load %arg4[%c0_3, %c0_4] : memref<1x32xf32, #tpu.memory_space<vmem>>, vector<1x32xf32>
    %c0_5 = arith.constant 0 : index
    %3 = memref.load %arg1[%c0_5] : memref<1xf32, #tpu.memory_space<smem>>
    %4 = vector.broadcast %1 : vector<1x32xf32> to vector<16x32xf32>
    %5 = arith.mulf %0, %4 : vector<16x32xf32>
    %cst = arith.constant dense<0.000000e+00> : vector<16xf32>
    %6 = vector.multi_reduction <add>, %5, %cst [1] : vector<16x32xf32> to vector<16xf32>
    %7 = vector.shape_cast %6 : vector<16xf32> to vector<16x1xf32>
    %8 = vector.broadcast %3 : f32 to vector<16x1xf32>
    %9 = arith.addf %7, %8 : vector<16x1xf32>
    %10 = math.tanh %9 : vector<16x1xf32>
    %11 = vector.broadcast %2 : vector<1x32xf32> to vector<16x32xf32>
    %12 = vector.broadcast %10 : vector<16x1xf32> to vector<16x32xf32>
    %13 = arith.mulf %11, %12 : vector<16x32xf32>
    %14 = arith.addf %0, %13 : vector<16x32xf32>
    %c0_6 = arith.constant 0 : index
    %c0_7 = arith.constant 0 : index
    %15 = vector.load %arg5[%c0_6, %c0_7] : memref<16x32xf32, #tpu.memory_space<vmem>>, vector<16x32xf32>
    tpu.vector_store %arg5[%c0_6, %c0_7], %14 {strides = array<i32>} : memref<16x32xf32, #tpu.memory_space<vmem>>, vector<16x32xf32>,
    %16 = arith.mulf %1, %2 : vector<1x32xf32>
    %cst_8 = arith.constant dense<0.000000e+00> : vector<1xf32>
    %17 = vector.multi_reduction <add>, %16, %cst_8 [1] : vector<1x32xf32> to vector<1xf32>
    %18 = vector.shape_cast %17 : vector<1xf32> to vector<1x1xf32>
    %19 = arith.mulf %10, %10 : vector<16x1xf32>
    %cst_9 = arith.constant 1.000000e+00 : f32
    %20 = vector.broadcast %cst_9 : f32 to vector<16x1xf32>
    %21 = arith.subf %20, %19 : vector<16x1xf32>
    %22 = vector.broadcast %18 : vector<1x1xf32> to vector<16x1xf32>
    %23 = arith.mulf %21, %22 : vector<16x1xf32>
    %cst_10 = arith.constant 1.000000e+00 : f32
    %24 = vector.broadcast %cst_10 : f32 to vector<16x1xf32>
    %25 = arith.addf %24, %23 : vector<16x1xf32>
    %26 = math.absf %25 : vector<16x1xf32>
    %27 = tpu.transpose %26, [1, 0] : vector<16x1xf32> -> vector<1x16xf32>
    %c0_11 = arith.constant 0 : index
    %c0_12 = arith.constant 0 : index
    %c0_13 = arith.constant 0 : index
    %28 = vector.load %arg6[%c0_11, %c0_12, %c0_13] : memref<1x1x16xf32, #tpu.memory_space<vmem>>, vector<1x1x16xf32>
    %29 = vector.shape_cast %28 : vector<1x1x16xf32> to vector<1x16xf32>
    %30 = vector.shape_cast %27 : vector<1x16xf32> to vector<1x1x16xf32>
    tpu.vector_store %arg6[%c0_11, %c0_12, %c0_13], %30 {strides = array<i32>} : memref<1x1x16xf32, #tpu.memory_space<vmem>>, vector<1x1x16xf32>,
    return
  }
  func.func @transform_0(%arg0: i32) -> i32 {
    %c0_i32 = arith.constant 0 : i32
    %c0_i32_0 = arith.constant 0 : i32
    return %c0_i32 : i32
  }
  func.func @transform_1(%arg0: i32) -> (i32, i32) {
    %c0_i32 = arith.constant 0 : i32
    %c0_i32_0 = arith.constant 0 : i32
    return %arg0, %c0_i32 : i32, i32
  }
  func.func @transform_2(%arg0: i32) -> (i32, i32) {
    %c0_i32 = arith.constant 0 : i32
    %c0_i32_0 = arith.constant 0 : i32
    %c0_i32_1 = arith.constant 0 : i32
    return %c0_i32, %c0_i32_0 : i32, i32
  }
  func.func @transform_3(%arg0: i32) -> (i32, i32) {
    %c0_i32 = arith.constant 0 : i32
    %c0_i32_0 = arith.constant 0 : i32
    %c0_i32_1 = arith.constant 0 : i32
    return %c0_i32, %c0_i32_0 : i32, i32
  }
  func.func @transform_4(%arg0: i32) -> (i32, i32) {
    %c0_i32 = arith.constant 0 : i32
    %c0_i32_0 = arith.constant 0 : i32
    return %arg0, %c0_i32 : i32, i32
  }
  func.func @transform_5(%arg0: i32) -> (i32, i32, i32) {
    %c0_i32 = arith.constant 0 : i32
    %c0_i32_0 = arith.constant 0 : i32
    %c0_i32_1 = arith.constant 0 : i32
    return %arg0, %c0_i32, %c0_i32_0 : i32, i32, i32
  }
}

</mosaic_0001>

<llo_original>
// kernel: tpu_custom_call.1
$region0: #{tpu_custom_call.1}
  #allocation0 [shape = 'u32[]', space=smem, size = 0x4, offset = 0x4, fixed_abs, tag = 'smem constant byte address 0x4 - core index']
  #allocation1 [shape = 'u32[144,128]{1,0:T(1,128)}', space=vmem, size = 0x12000, scoped, tag = 'internal scratch']
  #allocation2 [shape = 'f32[1]{0:T(128)S(6)}', space=smem, size = 0x200, scoped, tag = 'scoped memory for tpu_custom_call.1']
  %s0 = inlined_call_operand.<no memory space> [shape: f32[1], index: 0, kind: input, shape index: {}]
  %s1 = inlined_call_operand.hbm [shape: f32[16,32], index: 1, kind: input, shape index: {}]
  %s2 = inlined_call_operand.vmem [shape: f32[1,32], index: 2, kind: input, shape index: {}]
  %s3 = inlined_call_operand.vmem [shape: f32[1,32], index: 3, kind: input, shape index: {}]
  %s4 = inlined_call_operand.hbm [shape: f32[16,32], index: 4, kind: output, shape index: {0}]
  %s5 = inlined_call_operand.hbm [shape: f32[1,1,16], index: 5, kind: output, shape index: {1}]
  %6 = xla_tuple %s4, %s5
  %s7 = sld [smem:[#allocation0]]
  $region38: #{tpu_custom_call.1} parent=0
    _
  %s9 = ssub.s32 1, %s7
  %s10 = scalar_select 0, %s9, %s7
  %11 = sst [smem:[#allocation2]] %s0
  $region1: #{tpu_custom_call.1} parent=0
    #allocation3 [shape = 'u8[8192]{0}', space=vmem, size = 0x2000, scoped, tag = 'input window, operand 1, single buffered']
    #allocation4 [shape = 's32[1]{0}', space=sflag, size = 0x4, scoped, tag = 'scoped memory for tpu_custom_call.1']
    #allocation5 [shape = 's32[1]{0}', space=sflag, size = 0x4, scoped, tag = 'scoped memory for tpu_custom_call.1']
    #allocation6 [shape = 'u8[8192]{0}', space=vmem, size = 0x2000, scoped, tag = 'output window, operand 0, single buffered']
    #allocation7 [shape = 'u8[512]{0}', space=vmem, size = 0x400, scoped, tag = 'output window, operand 1, single buffered']
    #allocation8 [shape = 's32[1]{0}', space=sflag, size = 0x4, scoped, tag = 'scoped memory for tpu_custom_call.1']
    %12 = vsyncpa [#allocation4], 0
    %13 = vsyncpa [#allocation5], 0
    %14 = vsyncpa [#allocation8], 0
    // Predicated region
    $region2: #{tpu_custom_call.1} parent=1 // pred_check
      _
    $region3: #{tpu_custom_call.1} parent=1 // pred_check_branch
      %16 = sbr.rel (0) target = $region5
    $region4: #{tpu_custom_call.1} parent=1 // pred_region
      _
    $region5: #{tpu_custom_call.1} parent=1 // pred_fallthru
      _
    // Predicated region
    $region6: #{tpu_custom_call.1} parent=1 // pred_check
      _
    $region7: #{tpu_custom_call.1} parent=1 // pred_check_branch
      %18 = sbr.rel (0) target = $region9
    $region8: #{tpu_custom_call.1} parent=1 // pred_region
      %s20 = ssub.s32 256, 256
      %21 = vsyncadd [#allocation4], %s20
      %s22 = sshll.u32 [#allocation3], 4
      %s23 = int_to_ptr.vmem [resolvable:$true] %s22
      %28 = dma.hbm_to_vmem [thread:$0]  %s1, 256, %s23, [#allocation4], 128, 128, 8
    $region9: #{tpu_custom_call.1} parent=1 // pred_fallthru
      _
    // Predicated region
    $region10: #{tpu_custom_call.1} parent=1 // pred_check
      _
    $region11: #{tpu_custom_call.1} parent=1 // pred_check_branch
      %30 = sbr.rel (0) target = $region13
    $region12: #{tpu_custom_call.1} parent=1 // pred_region
      _
    $region13: #{tpu_custom_call.1} parent=1 // pred_fallthru
      _
    // Predicated region
    $region14: #{tpu_custom_call.1} parent=1 // pred_check
      _
    $region15: #{tpu_custom_call.1} parent=1 // pred_check_branch
      %32 = sbr.rel (0) target = $region17
    $region16: #{tpu_custom_call.1} parent=1 // pred_region
      _
    $region17: #{tpu_custom_call.1} parent=1 // pred_fallthru
      _
    // Predicated region
    $region18: #{tpu_custom_call.1} parent=1 // pred_check
      _
    $region19: #{tpu_custom_call.1} parent=1 // pred_check_branch
      %34 = sbr.rel (0) target = $region21
    $region20: #{tpu_custom_call.1} parent=1 // pred_region
      %35 = dma.done [#allocation4], 256
    $region21: #{tpu_custom_call.1} parent=1 // pred_fallthru
      _
    %v36 = vld [vmem:[#allocation3] sm:$0xff]
    %v37 = vld [vmem:[#allocation3 + $0x8] sm:$0xff]
    %v38 = vld [vmem:[%s2] sm:$0x1]
    %v39 = vld [vmem:[%s3] sm:$0x1]
    %s40 = sld [smem:[#allocation2]]
    %v42 = vlaneseq
    %v43 = vshrl.u32 %v42, 7
    %v44 = vsub.s32 0, %v43
    %v45 = vrot.slane %v38, %v44
    %v47 = vmul.f32 %v36, %v45
    %v48 = vmul.f32 %v37, %v45
    %vm49 = vcmask 261120
    %v50 = vsel %vm49, %v47, 0.0
    %51 = vadd.xlane.f32.xlu0 %v50
    %v52 = vpop.xlane.xlu0 %51
    %v53 = vsel %vm49, %v48, 0.0
    %54 = vadd.xlane.f32.xlu0 %v53
    %v55 = vpop.xlane.xlu0 %54
    %v56 = vstv %s40
    %v57 = vadd.f32 %v52, %v56
    %v58 = vadd.f32 %v55, %v56
    %v59 = vtanh.pop %v57
    %v60 = vtanh.pop %v58
    %v62 = vlaneseq
    %v63 = vshrl.u32 %v62, 7
    %v64 = vsub.s32 0, %v63
    %v65 = vrot.slane %v39, %v64
    %v67 = vmul.f32 %v65, %v59
    %v68 = vmul.f32 %v65, %v60
    %v69 = vadd.f32 %v36, %v67
    %v70 = vadd.f32 %v37, %v68
    %71 = vst.msk [vmem:[#allocation6] sm:$0xff] %vm49, %v69
    %72 = vst.msk [vmem:[#allocation6 + $0x8] sm:$0xff] %vm49, %v70
    %v73 = vmul.f32 %v38, %v39
    %vm74 = vcmask 253952
    %v75 = vsel %vm74, %v73, 0.0
    %76 = vadd.xlane.f32.xlu0 %v75
    %v77 = vpop.xlane.xlu0 %76
    %v78 = vmul.f32 %v59, %v59
    %v79 = vmul.f32 %v60, %v60
    %v80 = vsub.f32 1.0, %v78
    %v81 = vsub.f32 1.0, %v79
    %v82 = vlaneseq
    %v83 = vshrl.u32 %v82, 7
    %v84 = vsub.s32 0, %v83
    %v85 = vrot.slane %v77, %v84
    %v86 = vmul.f32 %v80, %v85
    %v87 = vmul.f32 %v81, %v85
    %v88 = vadd.f32 %v86, 1.0
    %v89 = vadd.f32 %v87, 1.0
    %v90 = vand.u32 2147483647, %v88
    %v91 = vand.u32 2147483647, %v89
    %92 = vxpose.xlu0.b32.start [1/16] %v90, 128
    %93 = vxpose.xlu0.b32.cont [2/16] %v91, 128
    %94 = vxpose.xlu0.b32.cont [3/16] 0.0, 128
    %95 = vxpose.xlu0.b32.cont [4/16] 0.0, 128
    %96 = vxpose.xlu0.b32.cont [5/16] 0.0, 128
    %97 = vxpose.xlu0.b32.cont [6/16] 0.0, 128
    %98 = vxpose.xlu0.b32.cont [7/16] 0.0, 128
    %99 = vxpose.xlu0.b32.cont [8/16] 0.0, 128
    %100 = vxpose.xlu0.b32.cont [9/16] 0.0, 128
    %101 = vxpose.xlu0.b32.cont [10/16] 0.0, 128
    %102 = vxpose.xlu0.b32.cont [11/16] 0.0, 128
    %103 = vxpose.xlu0.b32.cont [12/16] 0.0, 128
    %104 = vxpose.xlu0.b32.cont [13/16] 0.0, 128
    %105 = vxpose.xlu0.b32.cont [14/16] 0.0, 128
    %106 = vxpose.xlu0.b32.cont [15/16] 0.0, 128
    %107 = vxpose.xlu0.b32.end [16/16] 0.0, 128
    %v108 = vpop.trf.xlu0
    %v109 = vpop.trf.xlu0
    %v110 = vpop.trf.xlu0
    %v111 = vpop.trf.xlu0
    %v112 = vpop.trf.xlu0
    %v113 = vpop.trf.xlu0
    %v114 = vpop.trf.xlu0
    %v115 = vpop.trf.xlu0
    %v116 = vpop.trf.xlu0
    %v117 = vpop.trf.xlu0
    %v118 = vpop.trf.xlu0
    %v119 = vpop.trf.xlu0
    %v120 = vpop.trf.xlu0
    %v121 = vpop.trf.xlu0
    %v122 = vpop.trf.xlu0
    %v123 = vpop.trf.xlu0
    %vm124 = vcmask 122880
    %125 = vst.msk [vmem:[#allocation7] sm:$0x1] %vm124, %v108
    // Predicated region
    $region22: #{tpu_custom_call.1} parent=1 // pred_check
      _
    $region23: #{tpu_custom_call.1} parent=1 // pred_check_branch
      %127 = sbr.rel (0) target = $region25
    $region24: #{tpu_custom_call.1} parent=1 // pred_region
      %s129 = ssub.s32 256, 256
      %130 = vsyncadd [#allocation5], %s129
      %s131 = sshll.u32 [#allocation6], 4
      %s132 = int_to_ptr.vmem [resolvable:$true] %s131
      %137 = dma.vmem_to_hbm [thread:$0]  %s132, 256, %s4, [#allocation5], 128, 128, 8
    $region25: #{tpu_custom_call.1} parent=1 // pred_fallthru
      _
    // Predicated region
    $region26: #{tpu_custom_call.1} parent=1 // pred_check
      _
    $region27: #{tpu_custom_call.1} parent=1 // pred_check_branch
      %139 = sbr.rel (0) target = $region29
    $region28: #{tpu_custom_call.1} parent=1 // pred_region
      %s141 = ssub.s32 16, 16
      %142 = vsyncadd [#allocation8], %s141
      %s144 = sshll.u32 [#allocation7], 4
      %s145 = int_to_ptr.vmem [resolvable:$true] %s144
      %147 = dma.vmem_to_hbm [thread:$0]  %s145, 16, %s5, [#allocation8]
    $region29: #{tpu_custom_call.1} parent=1 // pred_fallthru
      _
    // Predicated region
    $region30: #{tpu_custom_call.1} parent=1 // pred_check
      _
    $region31: #{tpu_custom_call.1} parent=1 // pred_check_branch
      %149 = sbr.rel (0) target = $region33
    $region32: #{tpu_custom_call.1} parent=1 // pred_region
      %150 = dma.done [#allocation5], 256
    $region33: #{tpu_custom_call.1} parent=1 // pred_fallthru
      _
    // Predicated region
    $region34: #{tpu_custom_call.1} parent=1 // pred_check
      _
    $region35: #{tpu_custom_call.1} parent=1 // pred_check_branch
      %152 = sbr.rel (0) target = $region37
    $region36: #{tpu_custom_call.1} parent=1 // pred_region
      %153 = dma.done [#allocation8], 16
    $region37: #{tpu_custom_call.1} parent=1 // pred_fallthru
      _
    %154 = vsyncpa [#allocation4], 1
    %155 = vsyncpa [#allocation5], 1
    %156 = vsyncpa [#allocation8], 1

</llo_original>
